<compile_context>
chip_gen: v5e
topology: v5e:2x2
jax: 0.10.0
libtpu: 0.0.40
codegen_flags: <defaults>
</compile_context>

<pallas_src>
import math

import jax
import jax.numpy as jnp
from jax.experimental import pallas as pl
from jax.experimental.pallas import tpu as pltpu

_MASK_VALUE = -1e30  # finite "-inf": robust even if a whole vocab tile is padded


def _round_up(a, b):
    return -(-a // b) * b


def _vmem_capacity_bytes():
    """Physical per-TensorCore VMEM (generation-aware), conservative fallback."""
    try:
        info = pltpu.get_tpu_info()
        cap = getattr(info, "vmem_capacity_bytes", None)
        if cap:
            return int(cap)
    except Exception:
        pass
    return 64 << 20  # v7x per-TC VMEM; safe lower bound for v5e/v6e as well


def _vmem_estimate(tn, tv, h, xb, wb):
    return (2 * tn * h * xb        # x tile, double-buffered
            + 2 * h * tv * wb      # weight tile, double-buffered
            + 2 * tn * 4           # labels (int32), double-buffered
            + 2 * tn * 4           # per-row loss out, double-buffered
            + 3 * tn * 4           # m / s / corr scratch
            + 3 * tn * tv * 4      # ~3 live (tn,tv) f32 temps (logits/exp/select)
            + (4 << 20))           # compiler headroom


def proj_cross_entropy(x, w_t, y, *, v_true=None, tn=512, tv=1024,
                       ignore_index=-100):
    """x: (N, H) bf16/f32, w_t: (H, V_padded) bf16/f32, y: (N,) int.

    v_true is the real vocab size if w_t was pre-padded along its vocab axis.
    Returns mean cross-entropy over rows with y != ignore_index.
    """
    n, h = x.shape
    h2, v_stored = w_t.shape
    assert h == h2
    if v_true is None:
        v_true = v_stored

    xb = x.dtype.itemsize
    wb = w_t.dtype.itemsize

    # ---- tile selection ------------------------------------------------------
    tv = min(tv, _round_up(v_true, 128))
    tn = min(tn, _round_up(n, 16))          # bf16 sublane packing: 16 rows/vreg
    # v7x shards the parallel row axis across its 2 TensorCores: prefer >= 2 row
    # tiles when the batch is big enough, rather than one oversized tile.
    if tn > 256 and n > 256 and tn >= n:
        tn = 256

    vmem_cap = _vmem_capacity_bytes() - (8 << 20)   # leave compiler headroom
    while _vmem_estimate(tn, tv, h, xb, wb) > vmem_cap and tv > 512:
        tv //= 2
    while _vmem_estimate(tn, tv, h, xb, wb) > vmem_cap and tn > 256:
        tn //= 2
    # TODO(synk): for H >= 8-16K add a hidden (K) grid axis with an f32 (tn,tv)
    # accumulator so tn stays large within the per-TC VMEM budget (esp. v7x).

    n_pad = _round_up(n, tn)
    v_pad = _round_up(v_stored, tv)

    if n_pad != n:
        x = jnp.pad(x, ((0, n_pad - n), (0, 0)))
    if v_pad != v_stored:
        # Only hit when the caller did not pre-pad the weight (the module
        # wrapper pads once at init, so this is skipped on the hot path).
        w_t = jnp.pad(w_t, ((0, 0), (0, v_pad - v_stored)))
    y2 = jnp.pad(y.astype(jnp.int32), (0, n_pad - n),
                 constant_values=ignore_index).reshape(n_pad, 1)

    num_v_tiles = v_pad // tv
    num_n_tiles = n_pad // tn
    v_total = v_true  # static, closed over for tail-tile masking

    # ---- kernel --------------------------------------------------------------
    def kernel(x_ref, w_ref, y_ref, loss_ref, m_ref, s_ref, corr_ref):
        j = pl.program_id(1)

        @pl.when(j == 0)
        def _():
            m_ref[...] = jnp.full_like(m_ref, -jnp.inf)
            s_ref[...] = jnp.zeros_like(s_ref)
            corr_ref[...] = jnp.zeros_like(corr_ref)

        # (tn, tv) logits tile: bf16 operands, f32 MXU accumulation.
        logits = jnp.dot(x_ref[...], w_ref[...],
                         preferred_element_type=jnp.float32)

        col_local = jax.lax.broadcasted_iota(jnp.int32, logits.shape, 1)
        # tile-local target: per-step (tn,1) subtract instead of (tn,tv) add
        y_local = y_ref[...] - j * tv

        def update(lg):
            m_old = m_ref[...]
            m_new = jnp.maximum(m_old, lg.max(axis=-1, keepdims=True))
            s_ref[...] = (s_ref[...] * jnp.exp(m_old - m_new)
                          + jnp.exp(lg - m_new).sum(axis=-1, keepdims=True))
            m_ref[...] = m_new
            hit = col_local == y_local
            corr_ref[...] += jnp.sum(jnp.where(hit, lg, 0.0),
                                     axis=-1, keepdims=True)

        if v_pad != v_total:
            # Only tiles that extend past the real vocab pay the mask cost.
            needs_mask = (j + 1) * tv > v_total

            @pl.when(jnp.logical_not(needs_mask))
            def _():
                update(logits)

            @pl.when(needs_mask)
            def _():
                limit = v_total - j * tv
                update(jnp.where(col_local < limit, logits, _MASK_VALUE))
        else:
            update(logits)

        @pl.when(j == num_v_tiles - 1)
        def _():
            # per-row CE = logsumexp(logits) - logits[label]
            loss_ref[...] = m_ref[...] + jnp.log(s_ref[...]) - corr_ref[...]

    # ---- VMEM budget / cost hint --------------------------------------------
    est = _vmem_estimate(tn, tv, h, xb, wb)
    vmem_limit = int(min(max(est, 32 << 20), max(vmem_cap, 32 << 20)))

    cost = pl.CostEstimate(
        flops=2 * n_pad * h * v_pad,
        transcendentals=n_pad * v_pad,
        bytes_accessed=(num_n_tiles * h * v_pad * wb   # weight streamed per row tile
                        + n_pad * h * xb + n_pad * 4 + n_pad * 4),
    )

    per_row = pl.pallas_call(
        kernel,
        out_shape=jax.ShapeDtypeStruct((n_pad, 1), jnp.float32),
        grid_spec=pltpu.PrefetchScalarGridSpec(
            num_scalar_prefetch=0,
            grid=(num_n_tiles, num_v_tiles),
            in_specs=[
                pl.BlockSpec((tn, h), lambda i, j: (i, 0)),    # activations
                # TODO(synk): once MXU-bound, sweep pipeline_mode=pl.Buffered(3)
                # on this weight spec (per-step H*tv*2B DMA is the long pole).
                pl.BlockSpec((h, tv), lambda i, j: (0, j)),    # weight vocab tile
                pl.BlockSpec((tn, 1), lambda i, j: (i, 0)),    # labels
            ],
            out_specs=pl.BlockSpec((tn, 1), lambda i, j: (i, 0)),
            scratch_shapes=[
                pltpu.VMEM((tn, 1), jnp.float32),  # running max
                pltpu.VMEM((tn, 1), jnp.float32),  # running sum-exp
                pltpu.VMEM((tn, 1), jnp.float32),  # correct-class logit
            ],
        ),
        compiler_params=pltpu.CompilerParams(
            dimension_semantics=("parallel", "arbitrary"),
            vmem_limit_bytes=vmem_limit,
        ),
        cost_estimate=cost,
    )(x, w_t, y2)

    # mean over valid rows (drops row padding and ignore_index labels, matching
    # F.cross_entropy's default ignore_index=-100 / reduction='mean').
    per_row = per_row[:n, 0]
    valid = (y != ignore_index)
    denom = jnp.maximum(jnp.sum(valid.astype(jnp.float32)), 1.0)
    return jnp.sum(jnp.where(valid, per_row, 0.0)) / denom


class BaselineProjCEPallas:
    def __init__(self, hidden_size, vocab_size, key, *, tv=1024):
        # nn.Linear(hidden, vocab, bias=False): weight (vocab, hidden),
        # kaiming-uniform-like bound 1/sqrt(hidden); deterministic synthetic init.
        bound = 1.0 / math.sqrt(hidden_size)
        w = jax.random.uniform(key, (vocab_size, hidden_size),
                               minval=-bound, maxval=bound, dtype=jnp.float32)
        self.vocab_size = vocab_size
        # Pad the vocab axis ONCE here so the per-call path never re-copies the
        # full (H, V) weight in HBM.  Stored transposed as (H, V_pad) in bf16.
        self.tv = min(tv, _round_up(vocab_size, 128))
        v_pad = _round_up(vocab_size, self.tv)
        w_t = w.T.astype(jnp.bfloat16)
        if v_pad != vocab_size:
            w_t = jnp.pad(w_t, ((0, 0), (0, v_pad - vocab_size)))
        self.w_t = w_t
        # TODO(synk): fp8 weight storage with per-column scales on v7x (halves
        # weight HBM bytes / VMEM again; fold the scale into logits post-MXU).

    def __call__(self, x, y):
        # NOTE: out-of-range labels (other than ignore_index) are assumed valid;
        # they silently yield corr=0 unlike PyTorch's error.
        h = x.shape[-1]
        xf = x.reshape(-1, h).astype(jnp.bfloat16)
        yf = y.reshape(-1).astype(jnp.int32)
        return proj_cross_entropy(xf, self.w_t, yf,
                                  v_true=self.vocab_size, tv=self.tv)


def _reference(x_bf16, w_t_bf16, y):
    """Same bf16-quantized inputs, f32 math — matches the kernel numerics."""
    xf = x_bf16.reshape(-1, x_bf16.shape[-1]).astype(jnp.float32)
    wf = w_t_bf16.astype(jnp.float32)
    logits = jnp.dot(xf, wf, precision=jax.lax.Precision.HIGHEST)
    lse = jax.nn.logsumexp(logits, axis=-1)
    corr = jnp.take_along_axis(logits, y.reshape(-1, 1), axis=-1)[:, 0]
    return jnp.mean(lse - corr)


if __name__ == "__main__":
    batch, seq, hidden, vocab = 2, 8, 32, 256

    key = jax.random.PRNGKey(0)
    k_x, k_y, k_w = jax.random.split(key, 3)

    x = jax.random.normal(k_x, (batch, seq, hidden), dtype=jnp.float32)
    y = jax.random.randint(k_y, (batch, seq), 0, vocab, dtype=jnp.int32)

    module = BaselineProjCEPallas(hidden, vocab, k_w)

    loss = module(x, y)
    jax.block_until_ready(loss)

    ref = _reference(x.astype(jnp.bfloat16), module.w_t[:, :vocab], y)
    assert jnp.allclose(loss, ref, rtol=1e-3, atol=1e-3), (loss, ref)

    print("KERNEL_OK")
</pallas_src>

<mosaic_0001>
module attributes {stable_mosaic.version = 11 : i64} {
  func.func @kernel(%arg0: i32, %arg1: i32, %arg2: memref<16x32xbf16, #tpu.memory_space<vmem>>, %arg3: memref<32x256xbf16, #tpu.memory_space<vmem>>, %arg4: memref<16x1xi32, #tpu.memory_space<vmem>>, %arg5: memref<16x1xf32, #tpu.memory_space<vmem>>, %arg6: memref<16x1xf32, #tpu.memory_space<vmem>>, %arg7: memref<16x1xf32, #tpu.memory_space<vmem>>, %arg8: memref<16x1xf32, #tpu.memory_space<vmem>>) attributes {dimension_semantics = [#tpu.dimension_semantics<parallel>, #tpu.dimension_semantics<arbitrary>], iteration_bounds = array<i64: 1, 1>, scalar_prefetch = 0 : i64, scratch_operands = 3 : i64, tpu.core_type = #tpu.core_type<tc>, window_params = [{transform_indices = @transform_0, window_bounds = array<i64: 16, 32>}, {transform_indices = @transform_1, window_bounds = array<i64: 32, 256>}, {transform_indices = @transform_2, window_bounds = array<i64: 16, 1>}, {transform_indices = @transform_3, window_bounds = array<i64: 16, 1>}]} {
    %c0_i32 = arith.constant 0 : i32
    %0 = arith.cmpi eq, %arg1, %c0_i32 : i32
    %1 = arith.extui %0 : i1 to i32
    %c0_i32_0 = arith.constant 0 : i32
    %2 = arith.cmpi ne, %1, %c0_i32_0 : i32
    scf.if %2 {
      %cst_24 = arith.constant 0xFF800000 : f32
      %39 = vector.broadcast %cst_24 : f32 to vector<16x1xf32>
      %c0_25 = arith.constant 0 : index
      %c0_26 = arith.constant 0 : index
      %40 = vector.load %arg6[%c0_25, %c0_26] : memref<16x1xf32, #tpu.memory_space<vmem>>, vector<16x1xf32>
      tpu.vector_store %arg6[%c0_25, %c0_26], %39 {strides = array<i32>} : memref<16x1xf32, #tpu.memory_space<vmem>>, vector<16x1xf32>,
      %cst_27 = arith.constant 0.000000e+00 : f32
      %41 = vector.broadcast %cst_27 : f32 to vector<16x1xf32>
      %c0_28 = arith.constant 0 : index
      %c0_29 = arith.constant 0 : index
      %42 = vector.load %arg7[%c0_28, %c0_29] : memref<16x1xf32, #tpu.memory_space<vmem>>, vector<16x1xf32>
      tpu.vector_store %arg7[%c0_28, %c0_29], %41 {strides = array<i32>} : memref<16x1xf32, #tpu.memory_space<vmem>>, vector<16x1xf32>,
      %cst_30 = arith.constant 0.000000e+00 : f32
      %43 = vector.broadcast %cst_30 : f32 to vector<16x1xf32>
      %c0_31 = arith.constant 0 : index
      %c0_32 = arith.constant 0 : index
      %44 = vector.load %arg8[%c0_31, %c0_32] : memref<16x1xf32, #tpu.memory_space<vmem>>, vector<16x1xf32>
      tpu.vector_store %arg8[%c0_31, %c0_32], %43 {strides = array<i32>} : memref<16x1xf32, #tpu.memory_space<vmem>>, vector<16x1xf32>,
    } else {
    }
    %c0 = arith.constant 0 : index
    %c0_1 = arith.constant 0 : index
    %3 = vector.load %arg2[%c0, %c0_1] : memref<16x32xbf16, #tpu.memory_space<vmem>>, vector<16x32xbf16>
    %c0_2 = arith.constant 0 : index
    %c0_3 = arith.constant 0 : index
    %4 = vector.load %arg3[%c0_2, %c0_3] : memref<32x256xbf16, #tpu.memory_space<vmem>>, vector<32x256xbf16>
    %cst = arith.constant dense<0.000000e+00> : vector<16x256xf32>
    %5 = tpu.matmul %3, %4, %cst {dimension_numbers = #tpu.dot_dimension_numbers<[1], [0], [0], [1], [0, 0, 1, 1], [], []>} : vector<16x32xbf16>, vector<32x256xbf16>, vector<16x256xf32> -> vector<16x256xf32>
    %6 = tpu.iota {dimensions = array<i32: 1>} : vector<16x256xi32>
    %c0_4 = arith.constant 0 : index
    %c0_5 = arith.constant 0 : index
    %7 = vector.load %arg4[%c0_4, %c0_5] : memref<16x1xi32, #tpu.memory_space<vmem>>, vector<16x1xi32>
    %c256_i32 = arith.constant 256 : i32
    %8 = arith.muli %arg1, %c256_i32 : i32
    %9 = vector.broadcast %8 : i32 to vector<16x1xi32>
    %10 = arith.subi %7, %9 : vector<16x1xi32>
    %c0_6 = arith.constant 0 : index
    %c0_7 = arith.constant 0 : index
    %11 = vector.load %arg6[%c0_6, %c0_7] : memref<16x1xf32, #tpu.memory_space<vmem>>, vector<16x1xf32>
    %cst_8 = arith.constant dense<0xFF800000> : vector<16xf32>
    %12 = vector.multi_reduction <maximumf>, %5, %cst_8 [1] : vector<16x256xf32> to vector<16xf32>
    %13 = vector.shape_cast %12 : vector<16xf32> to vector<16x1xf32>
    %14 = arith.maximumf %11, %13 : vector<16x1xf32>
    %c0_9 = arith.constant 0 : index
    %c0_10 = arith.constant 0 : index
    %15 = vector.load %arg7[%c0_9, %c0_10] : memref<16x1xf32, #tpu.memory_space<vmem>>, vector<16x1xf32>
    %16 = arith.subf %11, %14 : vector<16x1xf32>
    %17 = math.exp %16 : vector<16x1xf32>
    %18 = arith.mulf %15, %17 : vector<16x1xf32>
    %19 = vector.broadcast %14 : vector<16x1xf32> to vector<16x256xf32>
    %20 = arith.subf %5, %19 : vector<16x256xf32>
    %21 = math.exp %20 : vector<16x256xf32>
    %cst_11 = arith.constant dense<0.000000e+00> : vector<16xf32>
    %22 = vector.multi_reduction <add>, %21, %cst_11 [1] : vector<16x256xf32> to vector<16xf32>
    %23 = vector.shape_cast %22 : vector<16xf32> to vector<16x1xf32>
    %24 = arith.addf %18, %23 : vector<16x1xf32>
    %c0_12 = arith.constant 0 : index
    %c0_13 = arith.constant 0 : index
    %25 = vector.load %arg7[%c0_12, %c0_13] : memref<16x1xf32, #tpu.memory_space<vmem>>, vector<16x1xf32>
    tpu.vector_store %arg7[%c0_12, %c0_13], %24 {strides = array<i32>} : memref<16x1xf32, #tpu.memory_space<vmem>>, vector<16x1xf32>,
    %c0_14 = arith.constant 0 : index
    %c0_15 = arith.constant 0 : index
    %26 = vector.load %arg6[%c0_14, %c0_15] : memref<16x1xf32, #tpu.memory_space<vmem>>, vector<16x1xf32>
    tpu.vector_store %arg6[%c0_14, %c0_15], %14 {strides = array<i32>} : memref<16x1xf32, #tpu.memory_space<vmem>>, vector<16x1xf32>,
    %27 = vector.broadcast %10 : vector<16x1xi32> to vector<16x256xi32>
    %28 = arith.cmpi eq, %6, %27 : vector<16x256xi32>
    %c0_16 = arith.constant 0 : index
    %c0_17 = arith.constant 0 : index
    %29 = vector.load %arg8[%c0_16, %c0_17] : memref<16x1xf32, #tpu.memory_space<vmem>>, vector<16x1xf32>
    %cst_18 = arith.constant 0.000000e+00 : f32
    %30 = vector.broadcast %cst_18 : f32 to vector<16x256xf32>
    %31 = arith.select %28, %5, %30 : vector<16x256xi1>, vector<16x256xf32>
    %cst_19 = arith.constant dense<0.000000e+00> : vector<16xf32>
    %32 = vector.multi_reduction <add>, %31, %cst_19 [1] : vector<16x256xf32> to vector<16xf32>
    %33 = vector.shape_cast %32 : vector<16xf32> to vector<16x1xf32>
    %34 = arith.addf %29, %33 : vector<16x1xf32>
    %c0_20 = arith.constant 0 : index
    %c0_21 = arith.constant 0 : index
    %35 = vector.load %arg8[%c0_20, %c0_21] : memref<16x1xf32, #tpu.memory_space<vmem>>, vector<16x1xf32>
    tpu.vector_store %arg8[%c0_20, %c0_21], %34 {strides = array<i32>} : memref<16x1xf32, #tpu.memory_space<vmem>>, vector<16x1xf32>,
    %c0_i32_22 = arith.constant 0 : i32
    %36 = arith.cmpi eq, %arg1, %c0_i32_22 : i32
    %37 = arith.extui %36 : i1 to i32
    %c0_i32_23 = arith.constant 0 : i32
    %38 = arith.cmpi ne, %37, %c0_i32_23 : i32
    scf.if %38 {
      %c0_24 = arith.constant 0 : index
      %c0_25 = arith.constant 0 : index
      %39 = vector.load %arg6[%c0_24, %c0_25] : memref<16x1xf32, #tpu.memory_space<vmem>>, vector<16x1xf32>
      %c0_26 = arith.constant 0 : index
      %c0_27 = arith.constant 0 : index
      %40 = vector.load %arg7[%c0_26, %c0_27] : memref<16x1xf32, #tpu.memory_space<vmem>>, vector<16x1xf32>
      %41 = math.log %40 : vector<16x1xf32>
      %42 = arith.addf %39, %41 : vector<16x1xf32>
      %c0_28 = arith.constant 0 : index
      %c0_29 = arith.constant 0 : index
      %43 = vector.load %arg8[%c0_28, %c0_29] : memref<16x1xf32, #tpu.memory_space<vmem>>, vector<16x1xf32>
      %44 = arith.subf %42, %43 : vector<16x1xf32>
      %c0_30 = arith.constant 0 : index
      %c0_31 = arith.constant 0 : index
      %45 = vector.load %arg5[%c0_30, %c0_31] : memref<16x1xf32, #tpu.memory_space<vmem>>, vector<16x1xf32>
      tpu.vector_store %arg5[%c0_30, %c0_31], %44 {strides = array<i32>} : memref<16x1xf32, #tpu.memory_space<vmem>>, vector<16x1xf32>,
    } else {
    }
    return
  }
  func.func @transform_0(%arg0: i32, %arg1: i32) -> (i32, i32) {
    %c0_i32 = arith.constant 0 : i32
    %c0_i32_0 = arith.constant 0 : i32
    return %arg0, %c0_i32 : i32, i32
  }
  func.func @transform_1(%arg0: i32, %arg1: i32) -> (i32, i32) {
    %c0_i32 = arith.constant 0 : i32
    %c0_i32_0 = arith.constant 0 : i32
    return %c0_i32, %arg1 : i32, i32
  }
  func.func @transform_2(%arg0: i32, %arg1: i32) -> (i32, i32) {
    %c0_i32 = arith.constant 0 : i32
    %c0_i32_0 = arith.constant 0 : i32
    return %arg0, %c0_i32 : i32, i32
  }
  func.func @transform_3(%arg0: i32, %arg1: i32) -> (i32, i32) {
    %c0_i32 = arith.constant 0 : i32
    %c0_i32_0 = arith.constant 0 : i32
    return %arg0, %c0_i32 : i32, i32
  }
}

</mosaic_0001>

<llo_original>
// kernel: tpu_custom_call.1
$region0: #{tpu_custom_call.1}
  #allocation0 [shape = 'u32[]', space=smem, size = 0x4, offset = 0x4, fixed_abs, tag = 'smem constant byte address 0x4 - core index']
  #allocation1 [shape = 'u32[72,128]{1,0:T(1,128)}', space=vmem, size = 0x9000, scoped, tag = 'internal scratch']
  #allocation2 [shape = 'f32[16,1]{1,0:T(8,128)}', space=vmem, size = 0x2000, scoped, tag = 'scratch operand']
  #allocation3 [shape = 'f32[16,1]{1,0:T(8,128)}', space=vmem, size = 0x2000, scoped, tag = 'scratch operand']
  #allocation4 [shape = 'f32[16,1]{1,0:T(8,128)}', space=vmem, size = 0x2000, scoped, tag = 'scratch operand']
  %s0 = inlined_call_operand.vmem [shape: bf16[16,32], index: 0, kind: input, shape index: {}]
  %s1 = inlined_call_operand.hbm [shape: bf16[32,256], index: 1, kind: input, shape index: {}]
  %s2 = inlined_call_operand.vmem [shape: s32[16,1], index: 2, kind: input, shape index: {}]
  %s3 = inlined_call_operand.vmem [shape: f32[16,1], index: 3, kind: output, shape index: {}]
  %s4 = sld [smem:[#allocation0]]
  $region34: #{tpu_custom_call.1} parent=0
    _
  %s6 = ssub.s32 1, %s4
  %s7 = scalar_select 0, %s6, %s4
  $region1: #{tpu_custom_call.1} parent=0
    #allocation5 [shape = 'u8[16384]{0}', space=vmem, size = 0x4000, scoped, tag = 'input window, operand 1, single buffered']
    #allocation6 [shape = 's32[1]{0}', space=sflag, size = 0x4, scoped, tag = 'scoped memory for tpu_custom_call.1']
    %8 = vsyncpa [#allocation6], 0
    // Predicated region
    $region2: #{tpu_custom_call.1} parent=1 // pred_check
      _
    $region3: #{tpu_custom_call.1} parent=1 // pred_check_branch
      %10 = sbr.rel (0) target = $region5
    $region4: #{tpu_custom_call.1} parent=1 // pred_region
      _
    $region5: #{tpu_custom_call.1} parent=1 // pred_fallthru
      _
    // Predicated region
    $region6: #{tpu_custom_call.1} parent=1 // pred_check
      _
    $region7: #{tpu_custom_call.1} parent=1 // pred_check_branch
      %12 = sbr.rel (0) target = $region9
    $region8: #{tpu_custom_call.1} parent=1 // pred_region
      %14 = vsyncadd [#allocation6], 0
      %s15 = sshll.u32 %s1, 4
      %s16 = int_to_ptr.hbm [resolvable:$true] %s15
      %s17 = sshll.u32 [#allocation5], 4
      %s18 = int_to_ptr.vmem [resolvable:$true] %s17
      %23 = dma.hbm_to_vmem [thread:$0]  %s16, 512, %s18, [#allocation6], 128, 128, 8
    $region9: #{tpu_custom_call.1} parent=1 // pred_fallthru
      _
    // Predicated region
    $region10: #{tpu_custom_call.1} parent=1 // pred_check
      _
    $region11: #{tpu_custom_call.1} parent=1 // pred_check_branch
      %25 = sbr.rel (0) target = $region13
    $region12: #{tpu_custom_call.1} parent=1 // pred_region
      _
    $region13: #{tpu_custom_call.1} parent=1 // pred_fallthru
      _
    // Predicated region
    $region14: #{tpu_custom_call.1} parent=1 // pred_check
      _
    $region15: #{tpu_custom_call.1} parent=1 // pred_check_branch
      %27 = sbr.rel (0) target = $region17
    $region16: #{tpu_custom_call.1} parent=1 // pred_region
      %29 = dma.done [#allocation6], 512
    $region17: #{tpu_custom_call.1} parent=1 // pred_fallthru
      _
    %p31 = scmp.eq.s32.totalorder 0, 0
    // Predicated region
    $region18: #{tpu_custom_call.1} parent=1 // pred_check
      %p32 = pneg %p31
    $region19: #{tpu_custom_call.1} parent=1 // pred_check_branch
      %34 = sbr.rel (%p32) target = $region21
    $region20: #{tpu_custom_call.1} parent=1 // pred_region
      %vm35 = vcmask 7168
      %36 = vst.msk [vmem:[#allocation2] sm:$0xff] %vm35, -inf
      %37 = vst.msk [vmem:[#allocation2 + $0x8] sm:$0xff] %vm35, -inf
      %38 = vst.msk [vmem:[#allocation3] sm:$0xff] %vm35, 0.0
      %39 = vst.msk [vmem:[#allocation3 + $0x8] sm:$0xff] %vm35, 0.0
      %40 = vst.msk [vmem:[#allocation4] sm:$0xff] %vm35, 0.0
      %41 = vst.msk [vmem:[#allocation4 + $0x8] sm:$0xff] %vm35, 0.0
    $region21: #{tpu_custom_call.1} parent=1 // pred_fallthru
      _
    %v42 = vld [vmem:[%s0] sm:$0xf]
    %v43 = vld [vmem:[%s0 + $0x4] sm:$0xf]
    %v44 = vld [vmem:[#allocation5] sm:$0xff]
    %v45 = vld [vmem:[#allocation5 + $0x8] sm:$0xff]
    %v46 = vld [vmem:[#allocation5 + $0x10] sm:$0xff]
    %v47 = vld [vmem:[#allocation5 + $0x18] sm:$0xff]
    %v50 = vunpack.c.l.b16 %v42
    %v51 = vunpack.c.l.b16 %v43
    %v52 = vpack.c.b16 %v51, %v50
    %v57 = vunpack.c.l.b16 %v44
    %v58 = vunpack.c.h.b16 %v44
    %v59 = vunpack.c.l.b16 %v45
    %v60 = vunpack.c.h.b16 %v45
    %v61 = vunpack.c.l.b16 %v46
    %v62 = vunpack.c.h.b16 %v46
    %v63 = vunpack.c.l.b16 %v47
    %v64 = vunpack.c.h.b16 %v47
    %v65 = vpack.c.b16 %v59, %v57
    %v66 = vpack.c.b16 %v60, %v58
    %v67 = vpack.c.b16 %v63, %v61
    %v68 = vpack.c.b16 %v64, %v62
    %vm73 = vcmask 261120
    %v75 = vsel %vm73, %v52, 0
    %77 = vmatpush.bf16.msra.mxu0 0
    %78 = vmatpush.bf16.msra.mxu0 0
    %79 = vmatpush.bf16.msra.mxu0 0
    %80 = vmatpush.bf16.msra.mxu0 0
    %81 = vmatpush.bf16.msra.mxu0 0
    %82 = vmatpush.bf16.msra.mxu0 0
    %83 = vmatpush.bf16.msra.mxu0 %v67
    %84 = vmatpush.bf16.msra.mxu0 %v65
    %85 = vmatmul.bf16.gmra.mxu0 %v75
    %v86 = vpop.f32.mrf.mxu0
    %v87 = vadd.f32 0.0, %v86
    %v88 = vpop.f32.mrf.mxu0
    %v89 = vadd.f32 0.0, %v88
    %90 = vdwg.mxu0
    %91 = vmatpush.bf16.msra.mxu0 0
    %92 = vmatpush.bf16.msra.mxu0 0
    %93 = vmatpush.bf16.msra.mxu0 0
    %94 = vmatpush.bf16.msra.mxu0 0
    %95 = vmatpush.bf16.msra.mxu0 0
    %96 = vmatpush.bf16.msra.mxu0 0
    %97 = vmatpush.bf16.msra.mxu0 %v68
    %98 = vmatpush.bf16.msra.mxu0 %v66
    %99 = vmatmul.bf16.gmra.mxu0 %v75
    %v100 = vpop.f32.mrf.mxu0
    %v101 = vadd.f32 0.0, %v100
    %v102 = vpop.f32.mrf.mxu0
    %v103 = vadd.f32 0.0, %v102
    %104 = vdwg.mxu0
    %v105 = vlaneseq
    %v106 = vand.u32 %v105, 127
    %v107 = vadd.s32 %v106, 128
    %v108 = vld [vmem:[%s2] sm:$0xff]
    %v109 = vld [vmem:[%s2 + $0x8] sm:$0xff]
    %s110 = smul.u32 0, 256
    %v111 = vstv %s110
    %v112 = vsub.s32 %v108, %v111
    %v113 = vsub.s32 %v109, %v111
    %v114 = vld [vmem:[#allocation2] sm:$0xff]
    %v115 = vld [vmem:[#allocation2 + $0x8] sm:$0xff]
    %v116 = vmax.f32 %v87, %v101
    %117 = vmax.xlane.f32.xlu0 %v116
    %v118 = vpop.xlane.xlu0 %117
    %v119 = vmax.f32 %v89, %v103
    %120 = vmax.xlane.f32.xlu0 %v119
    %v121 = vpop.xlane.xlu0 %120
    %v122 = vmax.f32 %v114, %v118
    %v123 = vmax.f32 %v115, %v121
    %v124 = vld [vmem:[#allocation3] sm:$0xff]
    %v125 = vld [vmem:[#allocation3 + $0x8] sm:$0xff]
    %v126 = vsub.f32 %v114, %v122
    %v127 = vsub.f32 %v115, %v123
    %v128 = vmul.f32 %v126, 1.442695
    %v129 = vpow.pop %v128
    %v130 = vmul.f32 %v127, 1.442695
    %v131 = vpow.pop %v130
    %v132 = vmul.f32 %v124, %v129
    %v133 = vmul.f32 %v125, %v131
    %135 = vset.pattern.permute.xlu0 0
    %136 = vperm.xlu0 %135, %v122
    %v137 = vpop.permute.xlu0 %136
    %140 = vset.pattern.permute.xlu0 0
    %141 = vperm.xlu0 %140, %v123
    %v142 = vpop.permute.xlu0 %141
    %v144 = vsub.f32 %v87, %v137
    %v145 = vsub.f32 %v101, %v137
    %v146 = vsub.f32 %v89, %v142
    %v147 = vsub.f32 %v103, %v142
    %v148 = vmul.f32 %v144, 1.442695
    %v149 = vpow.pop %v148
    %v150 = vmul.f32 %v145, 1.442695
    %v151 = vpow.pop %v150
    %v152 = vmul.f32 %v146, 1.442695
    %v153 = vpow.pop %v152
    %v154 = vmul.f32 %v147, 1.442695
    %v155 = vpow.pop %v154
    %v156 = vadd.f32 %v149, %v151
    %157 = vadd.xlane.f32.xlu0 %v156
    %v158 = vpop.xlane.xlu0 %157
    %v159 = vadd.f32 %v153, %v155
    %160 = vadd.xlane.f32.xlu0 %v159
    %v161 = vpop.xlane.xlu0 %160
    %v162 = vadd.f32 %v132, %v158
    %v163 = vadd.f32 %v133, %v161
    %vm164 = vcmask 7168
    %165 = vst.msk [vmem:[#allocation3] sm:$0xff] %vm164, %v162
    %166 = vst.msk [vmem:[#allocation3 + $0x8] sm:$0xff] %vm164, %v163
    %167 = vst.msk [vmem:[#allocation2] sm:$0xff] %vm164, %v122
    %168 = vst.msk [vmem:[#allocation2 + $0x8] sm:$0xff] %vm164, %v123
    %169 = vset.pattern.permute.xlu0 0
    %170 = vperm.xlu0 %169, %v112
    %v171 = vpop.permute.xlu0 %170
    %172 = vset.pattern.permute.xlu0 0
    %173 = vperm.xlu0 %172, %v113
    %v174 = vpop.permute.xlu0 %173
    %vm175 = vcmp.eq.s32.totalorder %v106, %v171
    %vm176 = vcmp.eq.s32.totalorder %v107, %v171
    %vm177 = vcmp.eq.s32.totalorder %v106, %v174
    %vm178 = vcmp.eq.s32.totalorder %v107, %v174
    %v179 = vld [vmem:[#allocation4] sm:$0xff]
    %v180 = vld [vmem:[#allocation4 + $0x8] sm:$0xff]
    %v181 = vsel %vm175, %v87, 0.0
    %v182 = vsel %vm176, %v101, 0.0
    %v183 = vsel %vm177, %v89, 0.0
    %v184 = vsel %vm178, %v103, 0.0
    %v185 = vadd.f32 %v181, %v182
    %186 = vadd.xlane.f32.xlu0 %v185
    %v187 = vpop.xlane.xlu0 %186
    %v188 = vadd.f32 %v183, %v184
    %189 = vadd.xlane.f32.xlu0 %v188
    %v190 = vpop.xlane.xlu0 %189
    %v191 = vadd.f32 %v179, %v187
    %v192 = vadd.f32 %v180, %v190
    %193 = vst.msk [vmem:[#allocation4] sm:$0xff] %vm164, %v191
    %194 = vst.msk [vmem:[#allocation4 + $0x8] sm:$0xff] %vm164, %v192
    // Predicated region
    $region22: #{tpu_custom_call.1} parent=1 // pred_check
      %p195 = pneg %p31
    $region23: #{tpu_custom_call.1} parent=1 // pred_check_branch
      %197 = sbr.rel (%p195) target = $region25
    $region24: #{tpu_custom_call.1} parent=1 // pred_region
      %v198 = vld [vmem:[#allocation2] sm:$0xff]
      %v199 = vld [vmem:[#allocation2 + $0x8] sm:$0xff]
      %v200 = vld [vmem:[#allocation3] sm:$0xff]
      %v201 = vld [vmem:[#allocation3 + $0x8] sm:$0xff]
      %v202 = vlog2.pop %v200
      %v203 = vmul.f32 %v202, 0.6931472
      %v204 = vlog2.pop %v201
      %v205 = vmul.f32 %v204, 0.6931472
      %v206 = vadd.f32 %v198, %v203
      %v207 = vadd.f32 %v199, %v205
      %v208 = vld [vmem:[#allocation4] sm:$0xff]
      %v209 = vld [vmem:[#allocation4 + $0x8] sm:$0xff]
      %v210 = vsub.f32 %v206, %v208
      %v211 = vsub.f32 %v207, %v209
      %212 = vst.msk [vmem:[%s3] sm:$0xff] %vm164, %v210
      %213 = vst.msk [vmem:[%s3 + $0x8] sm:$0xff] %vm164, %v211
    $region25: #{tpu_custom_call.1} parent=1 // pred_fallthru
      _
    // Predicated region
    $region26: #{tpu_custom_call.1} parent=1 // pred_check
      _
    $region27: #{tpu_custom_call.1} parent=1 // pred_check_branch
      %215 = sbr.rel (0) target = $region29
    $region28: #{tpu_custom_call.1} parent=1 // pred_region
      _
    $region29: #{tpu_custom_call.1} parent=1 // pred_fallthru
      _
    // Predicated region
    $region30: #{tpu_custom_call.1} parent=1 // pred_check
      _
    $region31: #{tpu_custom_call.1} parent=1 // pred_check_branch
      %217 = sbr.rel (0) target = $region33
    $region32: #{tpu_custom_call.1} parent=1 // pred_region
      _
    $region33: #{tpu_custom_call.1} parent=1 // pred_fallthru
      _
    %218 = vsyncpa [#allocation6], 1

</llo_original>
